<compile_context>
chip_gen: v7x
topology: tpu7x:2x2x1
jax: 0.10.0
libtpu: 0.0.40
codegen_flags: <defaults>
</compile_context>

<pallas_src>
import jax
import jax.numpy as jnp
from jax.experimental import pallas as pl
from jax.experimental.pallas import tpu as pltpu

# Parameter shape for this synthetic instantiation.
ROWS, COLS = 16, 128

_LANE = 128
_PALLAS_MIN_BYTES = 1 << 20      # below this: plain jnp.exp (launch overhead dominates)
_PIPELINE_MIN_BYTES = 1 << 20    # above this: aim for >=4 grid steps (DMA/compute overlap)


def _round_up(x: int, m: int) -> int:
    return -(-x // m) * m


def _exp_kernel(u_ref, o_ref):
    """ExpTransform for the `positive` constraint on `scale` (EUP exp)."""
    o_ref[...] = jnp.exp(u_ref[...])


def _vmem_capacity_bytes() -> int:
    try:
        return int(getattr(pltpu.get_tpu_info(), "vmem_capacity_bytes", 64 << 20))
    except Exception:
        return 64 << 20   # v7x-safe fallback


def _exp_pallas_2d(x: jax.Array) -> jax.Array:
    """Elementwise exp over a 2-D array with generation-aware, lane-dense tiling."""
    R, C = x.shape
    itemsize = jnp.dtype(x.dtype).itemsize
    numel = R * C
    total_bytes = numel * itemsize

    # Per-buffer budget: 1 in + 1 out, double-buffered = 4 buffers => ~vmem/4 total.
    vmem_cap = _vmem_capacity_bytes()
    budget = min(8 << 20, max(vmem_cap // 16, 1 << 20))

    # Sublane-pack aligned rows: 8 for f32, 16 for bf16, 32 for 8-bit.
    sub = 8 * max(4 // itemsize, 1)

    # Column tiling only if one sublane-aligned stripe across all of C blows the
    # budget (very wide arrays).  Tile C in multiples of 128 lanes (>=512 ideally).
    stripe_bytes = sub * C * itemsize
    if stripe_bytes <= budget or C <= _LANE:
        tile_c = C
    else:
        tile_c = max((budget // (sub * itemsize)) // _LANE, 4) * _LANE
        tile_c = min(tile_c, _round_up(C, _LANE))
    n_c = pl.cdiv(C, tile_c)

    # Row tiling.
    max_rows = max((budget // (tile_c * itemsize)) // sub * sub, sub)
    if R <= sub:
        tile_r = R                                   # full dim (legal block shape)
    elif total_bytes > _PIPELINE_MIN_BYTES:
        # Enough grid steps for pipelining and for v7x's 2 TensorCores.
        want_r_tiles = max(-(-4 // n_c), 2)
        tr = _round_up(-(-R // want_r_tiles), sub)
        tile_r = max(min(max_rows, tr), sub)
    else:
        tile_r = R if max_rows >= R else max_rows    # tiny forced case: single block

    grid = (pl.cdiv(R, tile_r), n_c)
    spec = pl.BlockSpec((tile_r, tile_c), lambda i, j: (i, j))

    tile_bytes = tile_r * tile_c * itemsize
    vmem_limit = int(min(vmem_cap, max(4 * tile_bytes + (2 << 20), 16 << 20)))

    return pl.pallas_call(
        _exp_kernel,
        out_shape=jax.ShapeDtypeStruct((R, C), x.dtype),
        grid=grid,
        in_specs=[spec],
        out_specs=spec,
        compiler_params=pltpu.CompilerParams(
            dimension_semantics=("parallel", "parallel"),
            vmem_limit_bytes=vmem_limit,
        ),
        cost_estimate=pl.CostEstimate(
            flops=0,
            transcendentals=numel,
            bytes_accessed=2 * numel * itemsize,
        ),
    )(x)


def _exp(x: jax.Array, *, force_pallas: bool = False) -> jax.Array:
    """ExpTransform with a size policy: tiny tensors skip the custom call."""
    total_bytes = x.size * jnp.dtype(x.dtype).itemsize
    if total_bytes < _PALLAS_MIN_BYTES and not force_pallas:
        # 100% launch/DMA-setup overhead for a sub-microsecond payload, and the
        # custom-call boundary blocks XLA fusion -> plain exp is strictly better.
        return jnp.exp(x)
    shape = x.shape
    if x.ndim == 2:
        x2 = x
    elif x.ndim == 1:
        x2 = x.reshape(1, -1)
    else:
        x2 = x.reshape(-1, shape[-1])
    return _exp_pallas_2d(x2).reshape(shape)


def parameterized_distribution_forward(unconstrained_loc: jax.Array,
                                       unconstrained_scale: jax.Array,
                                       *, force_pallas: bool = False):
    """Pallas equivalent of ParameterizedDistribution.forward() for Normal.

    Returns the constrained parameters {"loc", "scale"}.
    """
    assert unconstrained_loc.shape == unconstrained_scale.shape

    # transform_to(real) == IdentityTransform: no kernel, no copy.
    loc = unconstrained_loc

    # transform_to(positive) == ExpTransform.
    # TODO(synk): if a downstream kernel (sample / log_prob / KL) consumes these
    # params, fuse the exp there instead of materializing `scale` to HBM.
    scale = _exp(unconstrained_scale, force_pallas=force_pallas)

    # TODO(synk): torch.distributions Normal / TransformedDistribution object
    # construction is Python glue with no tensor compute; return params instead.
    return {"loc": loc, "scale": scale}


if __name__ == "__main__":
    key = jax.random.PRNGKey(0)
    k_loc, k_scale, k_big = jax.random.split(key, 3)

    # __init__ semantics: user passes *constrained* initial values; the module
    # stores unconstrained (inverse-transformed) values as trainable parameters.
    init_loc = jax.random.normal(k_loc, (ROWS, COLS), dtype=jnp.float32)           # real
    init_scale = jax.random.uniform(k_scale, (ROWS, COLS), dtype=jnp.float32,
                                    minval=0.1, maxval=2.0)                         # positive
    unconstrained_loc = init_loc                    # IdentityTransform.inv
    unconstrained_scale = jnp.log(init_scale)       # ExpTransform.inv

    # 1) Default policy at the module's shape (8 KiB -> fused jnp.exp path).
    dist_params = parameterized_distribution_forward(unconstrained_loc,
                                                     unconstrained_scale)
    jax.block_until_ready(dist_params)
    assert jnp.allclose(dist_params["loc"], unconstrained_loc, rtol=1e-6, atol=1e-6)
    assert jnp.allclose(dist_params["scale"], jnp.exp(unconstrained_scale),
                        rtol=1e-6, atol=1e-6)
    assert jnp.allclose(dist_params["scale"], init_scale, rtol=1e-5, atol=1e-5)

    # 2) Same shape, forcing the Pallas kernel path (verifies the kernel on TPU).
    dist_params_k = parameterized_distribution_forward(unconstrained_loc,
                                                       unconstrained_scale,
                                                       force_pallas=True)
    jax.block_until_ready(dist_params_k)
    assert jnp.allclose(dist_params_k["scale"], init_scale, rtol=1e-5, atol=1e-5)

    # 3) Mid-size parameter tensor (2 MiB) exercising the default pipelined
    #    Pallas path (>=4 grid steps, double-buffered DMA overlap).
    big_u = jax.random.normal(k_big, (512, 1024), dtype=jnp.float32)
    big_scale = _exp(big_u)
    jax.block_until_ready(big_scale)
    assert jnp.allclose(big_scale, jnp.exp(big_u), rtol=1e-6, atol=1e-6)

    print("KERNEL_OK")
</pallas_src>

<mosaic_0001>
module attributes {stable_mosaic.version = 11 : i64} {
  func.func @_exp_kernel(%arg0: i32, %arg1: i32, %arg2: memref<16x128xf32, #tpu.memory_space<vmem>>, %arg3: memref<16x128xf32, #tpu.memory_space<vmem>>) attributes {dimension_semantics = [#tpu.dimension_semantics<parallel>, #tpu.dimension_semantics<parallel>], iteration_bounds = array<i64: 1, 1>, scalar_prefetch = 0 : i64, scratch_operands = 0 : i64, tpu.core_type = #tpu.core_type<tc>, window_params = [{transform_indices = @transform_0, window_bounds = array<i64: 16, 128>}, {transform_indices = @transform_1, window_bounds = array<i64: 16, 128>}]} {
    %c0 = arith.constant 0 : index
    %c0_0 = arith.constant 0 : index
    %0 = vector.load %arg2[%c0, %c0_0] : memref<16x128xf32, #tpu.memory_space<vmem>>, vector<16x128xf32>
    %1 = math.exp %0 : vector<16x128xf32>
    %c0_1 = arith.constant 0 : index
    %c0_2 = arith.constant 0 : index
    %2 = vector.load %arg3[%c0_1, %c0_2] : memref<16x128xf32, #tpu.memory_space<vmem>>, vector<16x128xf32>
    tpu.vector_store %arg3[%c0_1, %c0_2], %1 {strides = array<i32>} : memref<16x128xf32, #tpu.memory_space<vmem>>, vector<16x128xf32>,
    return
  }
  func.func @transform_0(%arg0: i32, %arg1: i32) -> (i32, i32) {
    %c0_i32 = arith.constant 0 : i32
    return %arg0, %arg1 : i32, i32
  }
  func.func @transform_1(%arg0: i32, %arg1: i32) -> (i32, i32) {
    %c0_i32 = arith.constant 0 : i32
    return %arg0, %arg1 : i32, i32
  }
}

</mosaic_0001>

<llo_original>
// kernel: tpu_custom_call.1
$region0: #{tpu_custom_call.1}
  #allocation0 [shape = 'u32[]', space=smem, size = 0x4, offset = 0x4, fixed_abs, tag = 'smem constant byte address 0x4 - core index']
  #allocation1 [shape = 'u32[144,128]{1,0:T(1,128)}', space=vmem, size = 0x12000, scoped, tag = 'internal scratch']
  %s0 = inlined_call_operand.hbm [shape: f32[16,128], index: 0, kind: input, shape index: {}]
  %s1 = inlined_call_operand.hbm [shape: f32[16,128], index: 1, kind: output, shape index: {}]
  %s2 = sld [smem:[#allocation0]]
  $region18: #{tpu_custom_call.1} parent=0
    _
  %s4 = ssub.s32 1, %s2
  %s5 = scalar_select 0, %s4, %s2
  $region1: #{tpu_custom_call.1} parent=0
    #allocation2 [shape = 'u8[8192]{0}', space=vmem, size = 0x2000, scoped, tag = 'input window, operand 0, single buffered']
    #allocation3 [shape = 's32[1]{0}', space=sflag, size = 0x4, scoped, tag = 'scoped memory for tpu_custom_call.1']
    #allocation4 [shape = 's32[1]{0}', space=sflag, size = 0x4, scoped, tag = 'scoped memory for tpu_custom_call.1']
    #allocation5 [shape = 'u8[8192]{0}', space=vmem, size = 0x2000, scoped, tag = 'output window, operand 0, single buffered']
    %6 = vsyncpa [#allocation3], 0
    %7 = vsyncpa [#allocation4], 0
    // Predicated region
    $region2: #{tpu_custom_call.1} parent=1 // pred_check
      _
    $region3: #{tpu_custom_call.1} parent=1 // pred_check_branch
      %9 = sbr.rel (0) target = $region5
    $region4: #{tpu_custom_call.1} parent=1 // pred_region
      %s11 = ssub.s32 256, 256
      %12 = vsyncadd [#allocation3], %s11
      %s13 = sshll.u32 [#allocation2], 4
      %s14 = int_to_ptr.vmem [resolvable:$true] %s13
      %19 = dma.hbm_to_vmem [thread:$0]  %s0, 256, %s14, [#allocation3], 128, 128, 8
    $region5: #{tpu_custom_call.1} parent=1 // pred_fallthru
      _
    // Predicated region
    $region6: #{tpu_custom_call.1} parent=1 // pred_check
      _
    $region7: #{tpu_custom_call.1} parent=1 // pred_check_branch
      %21 = sbr.rel (0) target = $region9
    $region8: #{tpu_custom_call.1} parent=1 // pred_region
      %22 = dma.done [#allocation3], 256
    $region9: #{tpu_custom_call.1} parent=1 // pred_fallthru
      _
    %v23 = vld [vmem:[#allocation2] sm:$0xff]
    %v24 = vld [vmem:[#allocation2 + $0x8] sm:$0xff]
    %v25 = vmul.f32 %v23, 1.442695
    %v26 = vpow.pop %v25
    %v27 = vmul.f32 %v24, 1.442695
    %v28 = vpow.pop %v27
    %29 = vst [vmem:[#allocation5] sm:$0xff] %v26
    %30 = vst [vmem:[#allocation5 + $0x8] sm:$0xff] %v28
    // Predicated region
    $region10: #{tpu_custom_call.1} parent=1 // pred_check
      _
    $region11: #{tpu_custom_call.1} parent=1 // pred_check_branch
      %32 = sbr.rel (0) target = $region13
    $region12: #{tpu_custom_call.1} parent=1 // pred_region
      %s34 = ssub.s32 256, 256
      %35 = vsyncadd [#allocation4], %s34
      %s36 = sshll.u32 [#allocation5], 4
      %s37 = int_to_ptr.vmem [resolvable:$true] %s36
      %42 = dma.vmem_to_hbm [thread:$0]  %s37, 256, %s1, [#allocation4], 128, 128, 8
    $region13: #{tpu_custom_call.1} parent=1 // pred_fallthru
      _
    // Predicated region
    $region14: #{tpu_custom_call.1} parent=1 // pred_check
      _
    $region15: #{tpu_custom_call.1} parent=1 // pred_check_branch
      %44 = sbr.rel (0) target = $region17
    $region16: #{tpu_custom_call.1} parent=1 // pred_region
      %45 = dma.done [#allocation4], 256
    $region17: #{tpu_custom_call.1} parent=1 // pred_fallthru
      _
    %46 = vsyncpa [#allocation3], 1
    %47 = vsyncpa [#allocation4], 1

</llo_original>
